<compile_context>
chip_gen: v5e
topology: v5e:2x2
jax: 0.10.0
libtpu: 0.0.40
codegen_flags: <defaults>
</compile_context>

<pallas_src>
import functools
import math

import jax
import jax.numpy as jnp
from jax.experimental import pallas as pl
from jax.experimental.pallas import tpu as pltpu

LANE = 128


def _round_up(n, m):
    return ((n + m - 1) // m) * m


def _sigmoid(h):
    # Single EUP transcendental (tanh) instead of exp + reciprocal.
    return 0.5 * (jnp.tanh(0.5 * h) + 1.0)


def mlp_kernel(x_ref, w0_ref, b0_ref, w1_ref, b1_ref, w2_ref, b2_ref, o_ref,
               *, act_dtype):
    """Fused 3-layer MLP forward for one batch tile (bf16 MXU, f32 accum)."""
    # In-kernel bf16 cast of x: VPU work hidden under the tile DMA.
    x = x_ref[...].astype(w0_ref.dtype)
    h = jnp.dot(x, w0_ref[...], preferred_element_type=jnp.float32)
    h = _sigmoid((h + b0_ref[...]).astype(act_dtype))
    h = jnp.dot(h.astype(w1_ref.dtype), w1_ref[...],
                preferred_element_type=jnp.float32)
    h = _sigmoid((h + b1_ref[...]).astype(act_dtype))
    o = jnp.dot(h.astype(w2_ref.dtype), w2_ref[...],
                preferred_element_type=jnp.float32)
    o_ref[...] = (o + b2_ref[...]).astype(o_ref.dtype)


def init_params(key, inp_shape, hidden_shape, out_shape):
    """PyTorch nn.Linear-style init: U(-1/sqrt(fan_in), 1/sqrt(fan_in))."""
    dims = [inp_shape] + list(hidden_shape) + [out_shape]
    params = {}
    keys = jax.random.split(key, 2 * (len(dims) - 1))
    for li in range(len(dims) - 1):
        fan_in, fan_out = dims[li], dims[li + 1]
        bound = 1.0 / math.sqrt(fan_in)
        params[f"w{li}"] = jax.random.uniform(
            keys[2 * li], (fan_in, fan_out),
            minval=-bound, maxval=bound, dtype=jnp.float32)
        params[f"b{li}"] = jax.random.uniform(
            keys[2 * li + 1], (1, fan_out),
            minval=-bound, maxval=bound, dtype=jnp.float32)
    return params


def prepare_params(params):
    """One-time (off the hot path) lane padding + bf16 cast of MXU operands."""
    prepped = {}
    n_layers = len(params) // 2
    for li in range(n_layers):
        w = params[f"w{li}"]
        b = params[f"b{li}"]
        fan_in, fan_out = w.shape
        in_p = fan_in if li == 0 else _round_up(fan_in, LANE)
        out_p = _round_up(fan_out, LANE)
        # Padding must stay exactly zero for the cancellation argument to hold.
        w_pad = jnp.zeros((in_p, out_p), jnp.float32).at[:fan_in, :fan_out].set(w)
        b_pad = jnp.zeros((1, out_p), jnp.float32).at[:, :fan_out].set(b)
        prepped[f"w{li}"] = w_pad.astype(jnp.bfloat16)   # MXU operand
        prepped[f"b{li}"] = b_pad                        # f32 (post-accum add)
    return prepped


@functools.partial(jax.jit, static_argnames=("out_dim", "block_rows", "bf16_act"))
def net_forward(x, prepped, *, out_dim, block_rows=2048, bf16_act=False):
    """Forward pass of `Net`.

    x:         (B, inp) float32
    prepped:   output of prepare_params()
    out_dim:   un-padded output feature count
    block_rows: max batch-tile rows (v7x can profitably go 4096-8192)
    bf16_act:  evaluate bias-add + sigmoid in bf16 (v6e/v7x only)
    Returns (B, out_dim) bfloat16 (upcast downstream if f32 is required).
    """
    B, inp = x.shape
    b16 = _round_up(B, 16)
    tb = min(block_rows, b16)
    # Ensure >=2 grid steps whenever the batch allows a split, so the
    # "parallel" batch axis can be sharded across v7x's two TensorCores and
    # the software pipeline overlaps DMA with compute.
    if b16 // tb < 2 and b16 >= 32:
        tb = _round_up(pl.cdiv(b16, 2), 16)
    b_pad = _round_up(B, tb)

    # x stays f32 (bf16 cast is in-kernel); only a ragged tail forces a pad.
    if b_pad != B:
        x = jnp.pad(x, ((0, b_pad - B), (0, 0)))

    out_p = prepped["w2"].shape[1]
    const = lambda i: (0, 0)          # weights/biases resident across grid steps
    act_dtype = jnp.bfloat16 if bf16_act else jnp.float32
    kernel = functools.partial(mlp_kernel, act_dtype=act_dtype)

    y = pl.pallas_call(
        kernel,
        out_shape=jax.ShapeDtypeStruct((b_pad, out_p), jnp.bfloat16),
        grid_spec=pltpu.PrefetchScalarGridSpec(
            num_scalar_prefetch=0,
            grid=(b_pad // tb,),
            in_specs=[
                pl.BlockSpec((tb, inp), lambda i: (i, 0)),            # x streamed
                pl.BlockSpec(prepped["w0"].shape, const),
                pl.BlockSpec(prepped["b0"].shape, const),
                pl.BlockSpec(prepped["w1"].shape, const),
                pl.BlockSpec(prepped["b1"].shape, const),
                pl.BlockSpec(prepped["w2"].shape, const),
                pl.BlockSpec(prepped["b2"].shape, const),
            ],
            out_specs=pl.BlockSpec((tb, out_p), lambda i: (i, 0)),
        ),
        compiler_params=pltpu.CompilerParams(
            dimension_semantics=("parallel",)),                       # megacore
    )(x, prepped["w0"], prepped["b0"], prepped["w1"], prepped["b1"],
      prepped["w2"], prepped["b2"])

    return y[:B, :out_dim]


def _default_bf16_act():
    """bf16 EUP/VPU exists on v6e/v7x; keep f32 on v5e/v4 (and when unsure)."""
    try:
        kind = jax.devices()[0].device_kind.lower()
    except Exception:
        return False
    return not any(t in kind for t in ("v2", "v3", "v4", "v5"))


if __name__ == "__main__":
    # Shapes consistent with the module: hidden_shape=[50, 75], batch_size=64
    # from NET_PARAMS; small inp/out picked for the demo.  The default
    # block_rows plus the >=2-step rule yields a 2-step pipelined grid here.
    B, INP, HIDDEN, OUT = 64, 32, [50, 75], 10

    key = jax.random.PRNGKey(0)
    kx, kp = jax.random.split(key)
    x = jax.random.normal(kx, (B, INP), dtype=jnp.float32)
    params = init_params(kp, INP, HIDDEN, OUT)
    prepped = prepare_params(params)

    y = net_forward(x, prepped, out_dim=OUT, bf16_act=_default_bf16_act())
    y = jax.block_until_ready(y)

    # Pure-f32 JAX reference of the PyTorch module's forward.
    h = jax.nn.sigmoid(x @ params["w0"] + params["b0"])
    h = jax.nn.sigmoid(h @ params["w1"] + params["b1"])
    y_ref = h @ params["w2"] + params["b2"]

    assert y.shape == (B, OUT)
    assert y.dtype == jnp.bfloat16
    # Tolerance accounts for bf16 MXU operands, (optional) bf16 sigmoid math,
    # and the bf16 output store.
    y_f32 = y.astype(jnp.float32)
    assert jnp.allclose(y_f32, y_ref, atol=3e-2, rtol=3e-2), \
        float(jnp.max(jnp.abs(y_f32 - y_ref)))

    print("KERNEL_OK")
</pallas_src>

<mosaic_0001>
module attributes {stable_mosaic.version = 11 : i64} {
  func.func @mlp_kernel(%arg0: i32, %arg1: memref<32x32xf32, #tpu.memory_space<vmem>>, %arg2: memref<32x128xbf16, #tpu.memory_space<vmem>>, %arg3: memref<1x128xf32, #tpu.memory_space<vmem>>, %arg4: memref<128x128xbf16, #tpu.memory_space<vmem>>, %arg5: memref<1x128xf32, #tpu.memory_space<vmem>>, %arg6: memref<128x128xbf16, #tpu.memory_space<vmem>>, %arg7: memref<1x128xf32, #tpu.memory_space<vmem>>, %arg8: memref<32x128xbf16, #tpu.memory_space<vmem>>) attributes {dimension_semantics = [#tpu.dimension_semantics<parallel>], iteration_bounds = array<i64: 2>, scalar_prefetch = 0 : i64, scratch_operands = 0 : i64, tpu.core_type = #tpu.core_type<tc>, window_params = [{transform_indices = @transform_0, window_bounds = array<i64: 32, 32>}, {pipeline_mode = #tpu.pipeline_mode<synchronous>, transform_indices = @transform_1, window_bounds = array<i64: 32, 128>}, {pipeline_mode = #tpu.pipeline_mode<synchronous>, transform_indices = @transform_2, window_bounds = array<i64: 1, 128>}, {pipeline_mode = #tpu.pipeline_mode<synchronous>, transform_indices = @transform_3, window_bounds = array<i64: 128, 128>}, {pipeline_mode = #tpu.pipeline_mode<synchronous>, transform_indices = @transform_4, window_bounds = array<i64: 1, 128>}, {pipeline_mode = #tpu.pipeline_mode<synchronous>, transform_indices = @transform_5, window_bounds = array<i64: 128, 128>}, {pipeline_mode = #tpu.pipeline_mode<synchronous>, transform_indices = @transform_6, window_bounds = array<i64: 1, 128>}, {transform_indices = @transform_7, window_bounds = array<i64: 32, 128>}]} {
    %c0 = arith.constant 0 : index
    %c0_0 = arith.constant 0 : index
    %0 = vector.load %arg1[%c0, %c0_0] : memref<32x32xf32, #tpu.memory_space<vmem>>, vector<32x32xf32>
    %1 = arith.truncf %0 : vector<32x32xf32> to vector<32x32xbf16>
    %c0_1 = arith.constant 0 : index
    %c0_2 = arith.constant 0 : index
    %2 = vector.load %arg2[%c0_1, %c0_2] : memref<32x128xbf16, #tpu.memory_space<vmem>>, vector<32x128xbf16>
    %cst = arith.constant dense<0.000000e+00> : vector<32x128xf32>
    %3 = tpu.matmul %1, %2, %cst {dimension_numbers = #tpu.dot_dimension_numbers<[1], [0], [0], [1], [0, 0, 1, 1], [], []>} : vector<32x32xbf16>, vector<32x128xbf16>, vector<32x128xf32> -> vector<32x128xf32>
    %c0_3 = arith.constant 0 : index
    %c0_4 = arith.constant 0 : index
    %4 = vector.load %arg3[%c0_3, %c0_4] : memref<1x128xf32, #tpu.memory_space<vmem>>, vector<1x128xf32>
    %5 = vector.broadcast %4 : vector<1x128xf32> to vector<32x128xf32>
    %6 = arith.addf %3, %5 : vector<32x128xf32>
    %7 = arith.truncf %6 : vector<32x128xf32> to vector<32x128xbf16>
    %cst_5 = arith.constant 5.000000e-01 : bf16
    %8 = vector.broadcast %cst_5 : bf16 to vector<32x128xbf16>
    %9 = arith.mulf %8, %7 : vector<32x128xbf16>
    %10 = math.tanh %9 : vector<32x128xbf16>
    %cst_6 = arith.constant 1.000000e+00 : bf16
    %11 = vector.broadcast %cst_6 : bf16 to vector<32x128xbf16>
    %12 = arith.addf %10, %11 : vector<32x128xbf16>
    %cst_7 = arith.constant 5.000000e-01 : bf16
    %13 = vector.broadcast %cst_7 : bf16 to vector<32x128xbf16>
    %14 = arith.mulf %13, %12 : vector<32x128xbf16>
    %c0_8 = arith.constant 0 : index
    %c0_9 = arith.constant 0 : index
    %15 = vector.load %arg4[%c0_8, %c0_9] : memref<128x128xbf16, #tpu.memory_space<vmem>>, vector<128x128xbf16>
    %cst_10 = arith.constant dense<0.000000e+00> : vector<32x128xf32>
    %16 = tpu.matmul %14, %15, %cst_10 {dimension_numbers = #tpu.dot_dimension_numbers<[1], [0], [0], [1], [0, 0, 1, 1], [], []>} : vector<32x128xbf16>, vector<128x128xbf16>, vector<32x128xf32> -> vector<32x128xf32>
    %c0_11 = arith.constant 0 : index
    %c0_12 = arith.constant 0 : index
    %17 = vector.load %arg5[%c0_11, %c0_12] : memref<1x128xf32, #tpu.memory_space<vmem>>, vector<1x128xf32>
    %18 = vector.broadcast %17 : vector<1x128xf32> to vector<32x128xf32>
    %19 = arith.addf %16, %18 : vector<32x128xf32>
    %20 = arith.truncf %19 : vector<32x128xf32> to vector<32x128xbf16>
    %cst_13 = arith.constant 5.000000e-01 : bf16
    %21 = vector.broadcast %cst_13 : bf16 to vector<32x128xbf16>
    %22 = arith.mulf %21, %20 : vector<32x128xbf16>
    %23 = math.tanh %22 : vector<32x128xbf16>
    %cst_14 = arith.constant 1.000000e+00 : bf16
    %24 = vector.broadcast %cst_14 : bf16 to vector<32x128xbf16>
    %25 = arith.addf %23, %24 : vector<32x128xbf16>
    %cst_15 = arith.constant 5.000000e-01 : bf16
    %26 = vector.broadcast %cst_15 : bf16 to vector<32x128xbf16>
    %27 = arith.mulf %26, %25 : vector<32x128xbf16>
    %c0_16 = arith.constant 0 : index
    %c0_17 = arith.constant 0 : index
    %28 = vector.load %arg6[%c0_16, %c0_17] : memref<128x128xbf16, #tpu.memory_space<vmem>>, vector<128x128xbf16>
    %cst_18 = arith.constant dense<0.000000e+00> : vector<32x128xf32>
    %29 = tpu.matmul %27, %28, %cst_18 {dimension_numbers = #tpu.dot_dimension_numbers<[1], [0], [0], [1], [0, 0, 1, 1], [], []>} : vector<32x128xbf16>, vector<128x128xbf16>, vector<32x128xf32> -> vector<32x128xf32>
    %c0_19 = arith.constant 0 : index
    %c0_20 = arith.constant 0 : index
    %30 = vector.load %arg7[%c0_19, %c0_20] : memref<1x128xf32, #tpu.memory_space<vmem>>, vector<1x128xf32>
    %31 = vector.broadcast %30 : vector<1x128xf32> to vector<32x128xf32>
    %32 = arith.addf %29, %31 : vector<32x128xf32>
    %33 = arith.truncf %32 : vector<32x128xf32> to vector<32x128xbf16>
    %c0_21 = arith.constant 0 : index
    %c0_22 = arith.constant 0 : index
    %34 = vector.load %arg8[%c0_21, %c0_22] : memref<32x128xbf16, #tpu.memory_space<vmem>>, vector<32x128xbf16>
    tpu.vector_store %arg8[%c0_21, %c0_22], %33 {strides = array<i32>} : memref<32x128xbf16, #tpu.memory_space<vmem>>, vector<32x128xbf16>,
    return
  }
  func.func @transform_0(%arg0: i32) -> (i32, i32) {
    %c0_i32 = arith.constant 0 : i32
    %c0_i32_0 = arith.constant 0 : i32
    return %arg0, %c0_i32 : i32, i32
  }
  func.func @transform_1(%arg0: i32) -> (i32, i32) {
    %c0_i32 = arith.constant 0 : i32
    %c0_i32_0 = arith.constant 0 : i32
    %c0_i32_1 = arith.constant 0 : i32
    return %c0_i32, %c0_i32_0 : i32, i32
  }
  func.func @transform_2(%arg0: i32) -> (i32, i32) {
    %c0_i32 = arith.constant 0 : i32
    %c0_i32_0 = arith.constant 0 : i32
    %c0_i32_1 = arith.constant 0 : i32
    return %c0_i32, %c0_i32_0 : i32, i32
  }
  func.func @transform_3(%arg0: i32) -> (i32, i32) {
    %c0_i32 = arith.constant 0 : i32
    %c0_i32_0 = arith.constant 0 : i32
    %c0_i32_1 = arith.constant 0 : i32
    return %c0_i32, %c0_i32_0 : i32, i32
  }
  func.func @transform_4(%arg0: i32) -> (i32, i32) {
    %c0_i32 = arith.constant 0 : i32
    %c0_i32_0 = arith.constant 0 : i32
    %c0_i32_1 = arith.constant 0 : i32
    return %c0_i32, %c0_i32_0 : i32, i32
  }
  func.func @transform_5(%arg0: i32) -> (i32, i32) {
    %c0_i32 = arith.constant 0 : i32
    %c0_i32_0 = arith.constant 0 : i32
    %c0_i32_1 = arith.constant 0 : i32
    return %c0_i32, %c0_i32_0 : i32, i32
  }
  func.func @transform_6(%arg0: i32) -> (i32, i32) {
    %c0_i32 = arith.constant 0 : i32
    %c0_i32_0 = arith.constant 0 : i32
    %c0_i32_1 = arith.constant 0 : i32
    return %c0_i32, %c0_i32_0 : i32, i32
  }
  func.func @transform_7(%arg0: i32) -> (i32, i32) {
    %c0_i32 = arith.constant 0 : i32
    %c0_i32_0 = arith.constant 0 : i32
    return %arg0, %c0_i32 : i32, i32
  }
}

</mosaic_0001>

<llo_original>
// kernel: net_forward.1
$region0: #{net_forward.1}
  #allocation0 [shape = 'u32[]', space=smem, size = 0x4, offset = 0x4, fixed_abs, tag = 'smem constant byte address 0x4 - core index']
  #allocation1 [shape = 'u32[72,128]{1,0:T(1,128)}', space=vmem, size = 0x9000, scoped, tag = 'internal scratch']
  %s0 = inlined_call_operand.vmem [shape: f32[64,32], index: 0, kind: input, shape index: {}]
  %s1 = inlined_call_operand.vmem [shape: bf16[32,128], index: 1, kind: input, shape index: {}]
  %s2 = inlined_call_operand.vmem [shape: f32[1,128], index: 2, kind: input, shape index: {}]
  %s3 = inlined_call_operand.vmem [shape: bf16[128,128], index: 3, kind: input, shape index: {}]
  %s4 = inlined_call_operand.vmem [shape: f32[1,128], index: 4, kind: input, shape index: {}]
  %s5 = inlined_call_operand.hbm [shape: bf16[128,128], index: 5, kind: input, shape index: {}]
  %s6 = inlined_call_operand.vmem [shape: f32[1,128], index: 6, kind: input, shape index: {}]
  %s7 = inlined_call_operand.vmem [shape: bf16[64,128], index: 7, kind: output, shape index: {}]
  %s8 = sld [smem:[#allocation0]]
  $region65: #{net_forward.1} parent=0
    _
  %s10 = ssub.s32 1, %s8
  %s11 = scalar_select 0, %s10, %s8
  $region1: #{net_forward.1} parent=0
    #allocation2 [shape = 'u8[32768]{0}', space=vmem, size = 0x8000, scoped, tag = 'input window, operand 5, single buffered']
    #allocation3 [shape = 's32[2]{0}', space=sflag, size = 0x8, scoped, tag = 'scoped memory for net_forward.1']
    %12 = vsyncpa [#allocation3], 0
    loop: start=0, step=1, limit=4
    $region2: #{net_forward.1} parent=1 // loop_pre_header
      _
    $region3: #{net_forward.1} parent=1 // loop_header
      %s14 = sphi 0, %s18
      %p15 = scmp.ge.s32.totalorder %s14, 4
      %s24 = sphi 0, %s26
      %s27 = sphi 0, %s24
      %s28 = sphi 0, %s27
      %s44 = sphi 0, %s28
      %s48 = sphi 0, %s48
      %s50 = sphi 0, %s48
      %s51 = sphi 0, %s50
      %s65 = sphi 0, %s51
      %s69 = sphi 0, %s69
      %s71 = sphi 0, %s69
      %s72 = sphi 0, %s71
      %s86 = sphi 0, %s72
      %s90 = sphi 0, %s90
      %s92 = sphi 0, %s90
      %s93 = sphi 0, %s92
      %s107 = sphi 0, %s93
      %s111 = sphi 0, %s111
      %s113 = sphi 0, %s111
      %s114 = sphi 0, %s113
      %s128 = sphi 0, %s114
      %s132 = sphi 0, %s132
      %s134 = sphi 0, %s132
      %s135 = sphi 0, %s134
      %s149 = sphi 0, %s135
      %s153 = sphi 0, %s153
      %s155 = sphi 0, %s153
      %s156 = sphi 0, %s155
      %s170 = sphi 0, %s156
      %s176 = sphi 0, %s178
      %s179 = sphi 0, %s176
      %s180 = sphi 0, %s179
      %s196 = sphi 0, %s180
    $region4: #{net_forward.1} parent=1 // loop_header_branch
      %17 = sbr.rel (%p15) target = $region8
    $region5: #{net_forward.1} parent=1 // loop_body
      %s19 = ssub.s32 %s14, 1
      %s20 = ssub.s32 %s14, 2
      %s21 = sadd.s32 %s14, 1
      %s22 = ssub.s32 %s14, %s21
      %p23 = scmp.eq.s32.totalorder %s22, 0
      %s25 = sadd.s32 %s24, 1
      %s26 = scalar_select %p23, %s24, %s25
      %p29 = pneg %p23
      %p30 = scmp.eq.s32.totalorder %s14, 1
      %p31 = por %p29, %p30
      %p32 = scmp.ne.s32.totalorder %s24, %s27
      %p33 = scmp.eq.s32.totalorder %s14, 0
      %p34 = por %p32, %p33
      %p35 = scmp.ne.s32.totalorder %s24, %s27
      %p36 = scmp.eq.s32.totalorder %s19, 1
      %p37 = por %p35, %p36
      %p38 = scmp.ne.s32.totalorder %s27, %s28
      %p39 = scmp.eq.s32.totalorder %s19, 0
      %p40 = por %p38, %p39
      %p41 = scmp.ne.s32.totalorder %s27, %s28
      %p42 = scmp.eq.s32.totalorder %s20, 1
      %p43 = por %p41, %p42
      %p45 = scmp.ne.s32.totalorder %s28, %s44
      %p46 = scmp.eq.s32.totalorder %s20, 0
      %p47 = por %p45, %p46
      %s49 = sadd.s32 %s48, 1
      %p52 = scmp.eq.s32.totalorder %s14, 1
      %p53 = scmp.ne.s32.totalorder %s48, %s50
      %p54 = scmp.eq.s32.totalorder %s14, 0
      %p55 = por %p53, %p54
      %p56 = scmp.ne.s32.totalorder %s48, %s50
      %p57 = scmp.eq.s32.totalorder %s19, 1
      %p58 = por %p56, %p57
      %p59 = scmp.ne.s32.totalorder %s50, %s51
      %p60 = scmp.eq.s32.totalorder %s19, 0
      %p61 = por %p59, %p60
      %p62 = scmp.ne.s32.totalorder %s50, %s51
      %p63 = scmp.eq.s32.totalorder %s20, 1
      %p64 = por %p62, %p63
      %p66 = scmp.ne.s32.totalorder %s51, %s65
      %p67 = scmp.eq.s32.totalorder %s20, 0
      %p68 = por %p66, %p67
      %s70 = sadd.s32 %s69, 1
      %p73 = scmp.eq.s32.totalorder %s14, 1
      %p74 = scmp.ne.s32.totalorder %s69, %s71
      %p75 = scmp.eq.s32.totalorder %s14, 0
      %p76 = por %p74, %p75
      %p77 = scmp.ne.s32.totalorder %s69, %s71
      %p78 = scmp.eq.s32.totalorder %s19, 1
      %p79 = por %p77, %p78
      %p80 = scmp.ne.s32.totalorder %s71, %s72
      %p81 = scmp.eq.s32.totalorder %s19, 0
      %p82 = por %p80, %p81
      %p83 = scmp.ne.s32.totalorder %s71, %s72
      %p84 = scmp.eq.s32.totalorder %s20, 1
      %p85 = por %p83, %p84
      %p87 = scmp.ne.s32.totalorder %s72, %s86
      %p88 = scmp.eq.s32.totalorder %s20, 0
      %p89 = por %p87, %p88
      %s91 = sadd.s32 %s90, 1
      %p94 = scmp.eq.s32.totalorder %s14, 1
      %p95 = scmp.ne.s32.totalorder %s90, %s92
      %p96 = scmp.eq.s32.totalorder %s14, 0
      %p97 = por %p95, %p96
      %p98 = scmp.ne.s32.totalorder %s90, %s92
      %p99 = scmp.eq.s32.totalorder %s19, 1
      %p100 = por %p98, %p99
      %p101 = scmp.ne.s32.totalorder %s92, %s93
      %p102 = scmp.eq.s32.totalorder %s19, 0
      %p103 = por %p101, %p102
      %p104 = scmp.ne.s32.totalorder %s92, %s93
      %p105 = scmp.eq.s32.totalorder %s20, 1
      %p106 = por %p104, %p105
      %p108 = scmp.ne.s32.totalorder %s93, %s107
      %p109 = scmp.eq.s32.totalorder %s20, 0
      %p110 = por %p108, %p109
      %s112 = sadd.s32 %s111, 1
      %p115 = scmp.eq.s32.totalorder %s14, 1
      %p116 = scmp.ne.s32.totalorder %s111, %s113
      %p117 = scmp.eq.s32.totalorder %s14, 0
      %p118 = por %p116, %p117
      %p119 = scmp.ne.s32.totalorder %s111, %s113
      %p120 = scmp.eq.s32.totalorder %s19, 1
      %p121 = por %p119, %p120
      %p122 = scmp.ne.s32.totalorder %s113, %s114
      %p123 = scmp.eq.s32.totalorder %s19, 0
      %p124 = por %p122, %p123
      %p125 = scmp.ne.s32.totalorder %s113, %s114
      %p126 = scmp.eq.s32.totalorder %s20, 1
      %p127 = por %p125, %p126
      %p129 = scmp.ne.s32.totalorder %s114, %s128
      %p130 = scmp.eq.s32.totalorder %s20, 0
      %p131 = por %p129, %p130
      %s133 = sadd.s32 %s132, 1
      %p136 = scmp.eq.s32.totalorder %s14, 1
      %p137 = scmp.ne.s32.totalorder %s132, %s134
      %p138 = scmp.eq.s32.totalorder %s14, 0
      %p139 = por %p137, %p138
      %p140 = scmp.ne.s32.totalorder %s132, %s134
      %p141 = scmp.eq.s32.totalorder %s19, 1
      %p142 = por %p140, %p141
      %p143 = scmp.ne.s32.totalorder %s134, %s135
      %p144 = scmp.eq.s32.totalorder %s19, 0
      %p145 = por %p143, %p144
      %p146 = scmp.ne.s32.totalorder %s134, %s135
      %p147 = scmp.eq.s32.totalorder %s20, 1
      %p148 = por %p146, %p147
      %p150 = scmp.ne.s32.totalorder %s135, %s149
      %p151 = scmp.eq.s32.totalorder %s20, 0
      %p152 = por %p150, %p151
      %s154 = sadd.s32 %s153, 1
      %p157 = scmp.eq.s32.totalorder %s14, 1
      %p158 = scmp.ne.s32.totalorder %s153, %s155
      %p159 = scmp.eq.s32.totalorder %s14, 0
      %p160 = por %p158, %p159
      %p161 = scmp.ne.s32.totalorder %s153, %s155
      %p162 = scmp.eq.s32.totalorder %s19, 1
      %p163 = por %p161, %p162
      %p164 = scmp.ne.s32.totalorder %s155, %s156
      %p165 = scmp.eq.s32.totalorder %s19, 0
      %p166 = por %p164, %p165
      %p167 = scmp.ne.s32.totalorder %s155, %s156
      %p168 = scmp.eq.s32.totalorder %s20, 1
      %p169 = por %p167, %p168
      %p171 = scmp.ne.s32.totalorder %s156, %s170
      %p172 = scmp.eq.s32.totalorder %s20, 0
      %p173 = por %p171, %p172
      %s174 = ssub.s32 %s14, %s21
      %p175 = scmp.eq.s32.totalorder %s174, 0
      %s177 = sadd.s32 %s176, 1
      %s178 = scalar_select %p175, %s176, %s177
      %p181 = pneg %p175
      %p182 = scmp.eq.s32.totalorder %s14, 1
      %p183 = por %p181, %p182
      %p184 = scmp.ne.s32.totalorder %s176, %s179
      %p185 = scmp.eq.s32.totalorder %s14, 0
      %p186 = por %p184, %p185
      %p187 = scmp.ne.s32.totalorder %s176, %s179
      %p188 = scmp.eq.s32.totalorder %s19, 1
      %p189 = por %p187, %p188
      %p190 = scmp.ne.s32.totalorder %s179, %s180
      %p191 = scmp.eq.s32.totalorder %s19, 0
      %p192 = por %p190, %p191
      %p193 = scmp.ne.s32.totalorder %s179, %s180
      %p194 = scmp.eq.s32.totalorder %s20, 1
      %p195 = por %p193, %p194
      %p197 = scmp.ne.s32.totalorder %s180, %s196
      %p198 = scmp.eq.s32.totalorder %s20, 0
      %p199 = por %p197, %p198
      %p200 = scmp.le.s32.totalorder 1, %s14
      %p201 = scmp.lt.s32.totalorder %s14, 3
      %p202 = pnand %p200, %p201
      %p203 = pneg %p202
      // Predicated region
      $region9: #{net_forward.1} parent=5 // pred_check
        _
      $region10: #{net_forward.1} parent=5 // pred_check_branch
        %205 = sbr.rel (%p202) target = $region12
      $region11: #{net_forward.1} parent=5 // pred_region
        %s206 = ssub.s32 %s14, 1
        // Predicated region
        $region13: #{net_forward.1} parent=11 // pred_check
          %p207 = pneg %p61
        $region14: #{net_forward.1} parent=11 // pred_check_branch
          %209 = sbr.rel (%p207) target = $region16
        $region15: #{net_forward.1} parent=11 // pred_region
          _
        $region16: #{net_forward.1} parent=11 // pred_fallthru
          _
        // Predicated region
        $region17: #{net_forward.1} parent=11 // pred_check
          %p210 = pneg %p82
        $region18: #{net_forward.1} parent=11 // pred_check_branch
          %212 = sbr.rel (%p210) target = $region20
        $region19: #{net_forward.1} parent=11 // pred_region
          _
        $region20: #{net_forward.1} parent=11 // pred_fallthru
          _
        // Predicated region
        $region21: #{net_forward.1} parent=11 // pred_check
          %p213 = pneg %p103
        $region22: #{net_forward.1} parent=11 // pred_check_branch
          %215 = sbr.rel (%p213) target = $region24
        $region23: #{net_forward.1} parent=11 // pred_region
          _
        $region24: #{net_forward.1} parent=11 // pred_fallthru
          _
        // Predicated region
        $region25: #{net_forward.1} parent=11 // pred_check
          %p216 = pneg %p124
        $region26: #{net_forward.1} parent=11 // pred_check_branch
          %218 = sbr.rel (%p216) target = $region28
        $region27: #{net_forward.1} parent=11 // pred_region
          _
        $region28: #{net_forward.1} parent=11 // pred_fallthru
          _
        // Predicated region
        $region29: #{net_forward.1} parent=11 // pred_check
          %p219 = pneg %p145
        $region30: #{net_forward.1} parent=11 // pred_check_branch
          %221 = sbr.rel (%p219) target = $region32
        $region31: #{net_forward.1} parent=11 // pred_region
          %223 = vsyncadd [#allocation3], 0
          %s224 = sshll.u32 %s5, 4
          %s225 = int_to_ptr.hbm [resolvable:$true] %s224
          %s226 = sshll.u32 [#allocation2], 4
          %s227 = int_to_ptr.vmem [resolvable:$true] %s226
          %232 = dma.hbm_to_vmem [thread:$0]  %s225, 1024, %s227, [#allocation3], 64, 64, 4
        $region32: #{net_forward.1} parent=11 // pred_fallthru
          _
        // Predicated region
        $region33: #{net_forward.1} parent=11 // pred_check
          %p233 = pneg %p166
        $region34: #{net_forward.1} parent=11 // pred_check_branch
          %235 = sbr.rel (%p233) target = $region36
        $region35: #{net_forward.1} parent=11 // pred_region
          _
        $region36: #{net_forward.1} parent=11 // pred_fallthru
          _
      $region12: #{net_forward.1} parent=5 // pred_fallthru
        _
      %p236 = scmp.lt.s32.totalorder %s14, 2
      // Predicated region
      $region37: #{net_forward.1} parent=5 // pred_check
        %p237 = pneg %p236
      $region38: #{net_forward.1} parent=5 // pred_check_branch
        %239 = sbr.rel (%p237) target = $region40
      $region39: #{net_forward.1} parent=5 // pred_region
        // Predicated region
        $region41: #{net_forward.1} parent=39 // pred_check
          %p240 = pneg %p34
        $region42: #{net_forward.1} parent=39 // pred_check_branch
          %242 = sbr.rel (%p240) target = $region44
        $region43: #{net_forward.1} parent=39 // pred_region
          %s243 = smul.u32 4, %s14
          %p244 = scmp.lt.s32.totalorder %s243, 7
          %s245 = scalar_select %p244, %s243, 7
          %s246 = smul.addr %s245, 8
          %s247 = scalar_lea.vmem %s0, %s246
          %s248 = smul.u32 4, %s14
        $region44: #{net_forward.1} parent=39 // pred_fallthru
          _
      $region40: #{net_forward.1} parent=5 // pred_fallthru
        _
      %p249 = scmp.le.s32.totalorder 1, %s14
      %p250 = scmp.lt.s32.totalorder %s14, 3
      %p251 = pnand %p249, %p250
      %p252 = pneg %p251
      // Predicated region
      $region45: #{net_forward.1} parent=5 // pred_check
        _
      $region46: #{net_forward.1} parent=5 // pred_check_branch
        %254 = sbr.rel (%p251) target = $region48
      $region47: #{net_forward.1} parent=5 // pred_region
        %s255 = ssub.s32 %s14, 1
        // Predicated region
        $region49: #{net_forward.1} parent=47 // pred_check
          %p256 = pneg %p145
        $region50: #{net_forward.1} parent=47 // pred_check_branch
          %258 = sbr.rel (%p256) target = $region52
        $region51: #{net_forward.1} parent=47 // pred_region
          %260 = dma.done [#allocation3], 1024
        $region52: #{net_forward.1} parent=47 // pred_fallthru
          _
        %s261 = smul.u32 4, %s19
        %p262 = scmp.lt.s32.totalorder %s261, 7
        %s263 = scalar_select %p262, %s261, 7
        %s264 = smul.addr %s263, 8
        %s265 = scalar_lea.vmem %s0, %s264
        %p266 = pneg %p40
        %p267 = pneg %p37
        %p268 = pneg %p61
        %p269 = pneg %p58
        %p270 = pneg %p82
        %p271 = pneg %p79
        %p272 = pneg %p103
        %p273 = pneg %p100
        %p274 = pneg %p124
        %p275 = pneg %p121
        %p276 = pneg %p145
        %p277 = pneg %p142
        %p278 = pneg %p166
        %p279 = pneg %p163
        %p280 = pneg %p192
        %p281 = pneg %p189
        %s282 = smul.u32 4, %s19
        %p283 = scmp.lt.s32.totalorder %s282, 7
        %s284 = scalar_select %p283, %s282, 7
        %s285 = smul.addr %s284, 4
        %s286 = scalar_lea.vmem %s7, %s285
        %s287 = smul.u32 4, %s19
        %p288 = scmp.lt.s32.totalorder %s287, 7
        %s289 = scalar_select %p288, %s287, 7
        %s290 = smul.addr %s289, 8
        %s291 = scalar_lea.vmem %s0, %s290
        %s292 = smul.u32 4, %s19
        %s293 = smul.u32 4, %s19
        %p294 = scmp.lt.s32.totalorder %s293, 7
        %s295 = scalar_select %p294, %s293, 7
        %s296 = smul.addr %s295, 4
        %s297 = scalar_lea.vmem %s7, %s296
        %s298 = smul.u32 4, %s19
        %v300 = vld [vmem:[%s291] sm:$0xff]
        %v301 = vld [vmem:[%s291 + $0x8] sm:$0xff]
        %v302 = vld [vmem:[%s291 + $0x10] sm:$0xff]
        %v303 = vld [vmem:[%s291 + $0x18] sm:$0xff]
        %v304 = vpack.c.bf16 %v301, %v300
        %v305 = vpack.c.bf16 %v303, %v302
        %v306 = vld [vmem:[%s1] sm:$0xf]
        %v307 = vld [vmem:[%s1 + $0x4] sm:$0xf]
        %v308 = vld [vmem:[%s1 + $0x8] sm:$0xf]
        %v309 = vld [vmem:[%s1 + $0xc] sm:$0xf]
        %v310 = vld [vmem:[%s2] sm:$0x1]
        %v312 = vperm.slane %v310, 0
        %v318 = vunpack.c.l.b16 %v306
        %v319 = vunpack.c.l.b16 %v307
        %v320 = vunpack.c.l.b16 %v308
        %v321 = vunpack.c.l.b16 %v309
        %v322 = vpack.c.b16 %v319, %v318
        %v323 = vpack.c.b16 %v321, %v320
        %vm326 = vcmask 261120
        %v328 = vsel %vm326, %v304, 0
        %v331 = vsel %vm326, %v305, 0
        %333 = vmatpush.bf16.msra.mxu0 0
        %334 = vmatpush.bf16.msra.mxu0 0
        %335 = vmatpush.bf16.msra.mxu0 0
        %336 = vmatpush.bf16.msra.mxu0 0
        %337 = vmatpush.bf16.msra.mxu0 0
        %338 = vmatpush.bf16.msra.mxu0 0
        %339 = vmatpush.bf16.msra.mxu0 %v323
        %340 = vmatpush.bf16.msra.mxu0 %v322
        %341 = vmatmul.bf16.gmra.mxu0 %v328
        %v342 = vpop.f32.mrf.mxu0
        %v343 = vadd.f32 %v312, %v342
        %v344 = vpop.f32.mrf.mxu0
        %v345 = vadd.f32 %v312, %v344
        %346 = vmatmul.bf16.gmra.mxu0 %v331
        %v347 = vpop.f32.mrf.mxu0
        %v348 = vadd.f32 %v312, %v347
        %v349 = vpop.f32.mrf.mxu0
        %v350 = vadd.f32 %v312, %v349
        %351 = vdwg.mxu0
        %v352 = vpack.c.bf16 %v343, %v343
        %v353 = vpack.c.bf16 %v345, %v345
        %v354 = vpack.c.bf16 %v348, %v348
        %v355 = vpack.c.bf16 %v350, %v350
        %v356 = vunpack.c.l.bf16 %v352
        %v357 = vunpack.c.l.bf16 %v353
        %v358 = vunpack.c.l.bf16 %v354
        %v359 = vunpack.c.l.bf16 %v355
        %v360 = vmul.f32 %v356, 0.5
        %v361 = vmul.f32 %v357, 0.5
        %v362 = vmul.f32 %v358, 0.5
        %v363 = vmul.f32 %v359, 0.5
        %v364 = vpack.c.bf16 %v360, %v360
        %v365 = vpack.c.bf16 %v361, %v361
        %v366 = vpack.c.bf16 %v362, %v362
        %v367 = vpack.c.bf16 %v363, %v363
        %v368 = vunpack.c.l.bf16 %v364
        %v369 = vunpack.c.l.bf16 %v365
        %v370 = vunpack.c.l.bf16 %v366
        %v371 = vunpack.c.l.bf16 %v367
        %v372 = vtanh.pop %v368
        %v373 = vtanh.pop %v369
        %v374 = vtanh.pop %v370
        %v375 = vtanh.pop %v371
        %v376 = vpack.c.bf16 %v372, %v372
        %v377 = vpack.c.bf16 %v373, %v373
        %v378 = vpack.c.bf16 %v374, %v374
        %v379 = vpack.c.bf16 %v375, %v375
        %v380 = vunpack.c.l.bf16 %v376
        %v381 = vunpack.c.l.bf16 %v377
        %v382 = vunpack.c.l.bf16 %v378
        %v383 = vunpack.c.l.bf16 %v379
        %v384 = vadd.f32 %v380, 1.0
        %v385 = vadd.f32 %v381, 1.0
        %v386 = vadd.f32 %v382, 1.0
        %v387 = vadd.f32 %v383, 1.0
        %v388 = vpack.c.bf16 %v384, %v384
        %v389 = vpack.c.bf16 %v385, %v385
        %v390 = vpack.c.bf16 %v386, %v386
        %v391 = vpack.c.bf16 %v387, %v387
        %v392 = vunpack.c.l.bf16 %v388
        %v393 = vunpack.c.l.bf16 %v389
        %v394 = vunpack.c.l.bf16 %v390
        %v395 = vunpack.c.l.bf16 %v391
        %v396 = vmul.f32 %v392, 0.5
        %v397 = vmul.f32 %v393, 0.5
        %v398 = vmul.f32 %v394, 0.5
        %v399 = vmul.f32 %v395, 0.5
        %v400 = vpack.c.bf16 %v397, %v396
        %v401 = vpack.c.bf16 %v399, %v398
        %v402 = vld [vmem:[%s3] sm:$0xf]
        %v403 = vld [vmem:[%s3 + $0x4] sm:$0xf]
        %v404 = vld [vmem:[%s3 + $0x8] sm:$0xf]
        %v405 = vld [vmem:[%s3 + $0xc] sm:$0xf]
        %v406 = vld [vmem:[%s3 + $0x10] sm:$0xf]
        %v407 = vld [vmem:[%s3 + $0x14] sm:$0xf]
        %v408 = vld [vmem:[%s3 + $0x18] sm:$0xf]
        %v409 = vld [vmem:[%s3 + $0x1c] sm:$0xf]
        %v410 = vld [vmem:[%s3 + $0x20] sm:$0xf]
        %v411 = vld [vmem:[%s3 + $0x24] sm:$0xf]
        %v412 = vld [vmem:[%s3 + $0x28] sm:$0xf]
        %v413 = vld [vmem:[%s3 + $0x2c] sm:$0xf]
        %v414 = vld [vmem:[%s3 + $0x30] sm:$0xf]
        %v415 = vld [vmem:[%s3 + $0x34] sm:$0xf]
        %v416 = vld [vmem:[%s3 + $0x38] sm:$0xf]
        %v417 = vld [vmem:[%s3 + $0x3c] sm:$0xf]
        %v418 = vld [vmem:[%s4] sm:$0x1]
        %v420 = vperm.slane %v418, 0
        %v438 = vunpack.c.l.b16 %v402
        %v439 = vunpack.c.l.b16 %v403
        %v440 = vunpack.c.l.b16 %v404
        %v441 = vunpack.c.l.b16 %v405
        %v442 = vunpack.c.l.b16 %v406
        %v443 = vunpack.c.l.b16 %v407
        %v444 = vunpack.c.l.b16 %v408
        %v445 = vunpack.c.l.b16 %v409
        %v446 = vunpack.c.l.b16 %v410
        %v447 = vunpack.c.l.b16 %v411
        %v448 = vunpack.c.l.b16 %v412
        %v449 = vunpack.c.l.b16 %v413
        %v450 = vunpack.c.l.b16 %v414
        %v451 = vunpack.c.l.b16 %v415
        %v452 = vunpack.c.l.b16 %v416
        %v453 = vunpack.c.l.b16 %v417
        %v454 = vpack.c.b16 %v439, %v438
        %v455 = vpack.c.b16 %v441, %v440
        %v456 = vpack.c.b16 %v443, %v442
        %v457 = vpack.c.b16 %v445, %v444
        %v458 = vpack.c.b16 %v447, %v446
        %v459 = vpack.c.b16 %v449, %v448
        %v460 = vpack.c.b16 %v451, %v450
        %v461 = vpack.c.b16 %v453, %v452
        %470 = vmatpush.bf16.msra.mxu0 %v461
        %471 = vmatpush.bf16.msra.mxu0 %v460
        %472 = vmatpush.bf16.msra.mxu0 %v459
        %473 = vmatpush.bf16.msra.mxu0 %v458
        %474 = vmatpush.bf16.msra.mxu0 %v457
        %475 = vmatpush.bf16.msra.mxu0 %v456
        %476 = vmatpush.bf16.msra.mxu0 %v455
        %477 = vmatpush.bf16.msra.mxu0 %v454
        %478 = vmatmul.bf16.gmra.mxu0 %v400
        %v479 = vpop.f32.mrf.mxu0
        %v480 = vadd.f32 %v420, %v479
        %v481 = vpop.f32.mrf.mxu0
        %v482 = vadd.f32 %v420, %v481
        %483 = vmatmul.bf16.gmra.mxu0 %v401
        %v484 = vpop.f32.mrf.mxu0
        %v485 = vadd.f32 %v420, %v484
        %v486 = vpop.f32.mrf.mxu0
        %v487 = vadd.f32 %v420, %v486
        %488 = vdwg.mxu0
        %v489 = vpack.c.bf16 %v480, %v480
        %v490 = vpack.c.bf16 %v482, %v482
        %v491 = vpack.c.bf16 %v485, %v485
        %v492 = vpack.c.bf16 %v487, %v487
        %v493 = vunpack.c.l.bf16 %v489
        %v494 = vunpack.c.l.bf16 %v490
        %v495 = vunpack.c.l.bf16 %v491
        %v496 = vunpack.c.l.bf16 %v492
        %v497 = vmul.f32 %v493, 0.5
        %v498 = vmul.f32 %v494, 0.5
        %v499 = vmul.f32 %v495, 0.5
        %v500 = vmul.f32 %v496, 0.5
        %v501 = vpack.c.bf16 %v497, %v497
        %v502 = vpack.c.bf16 %v498, %v498
        %v503 = vpack.c.bf16 %v499, %v499
        %v504 = vpack.c.bf16 %v500, %v500
        %v505 = vunpack.c.l.bf16 %v501
        %v506 = vunpack.c.l.bf16 %v502
        %v507 = vunpack.c.l.bf16 %v503
        %v508 = vunpack.c.l.bf16 %v504
        %v509 = vtanh.pop %v505
        %v510 = vtanh.pop %v506
        %v511 = vtanh.pop %v507
        %v512 = vtanh.pop %v508
        %v513 = vpack.c.bf16 %v509, %v509
        %v514 = vpack.c.bf16 %v510, %v510
        %v515 = vpack.c.bf16 %v511, %v511
        %v516 = vpack.c.bf16 %v512, %v512
        %v517 = vunpack.c.l.bf16 %v513
        %v518 = vunpack.c.l.bf16 %v514
        %v519 = vunpack.c.l.bf16 %v515
        %v520 = vunpack.c.l.bf16 %v516
        %v521 = vadd.f32 %v517, 1.0
        %v522 = vadd.f32 %v518, 1.0
        %v523 = vadd.f32 %v519, 1.0
        %v524 = vadd.f32 %v520, 1.0
        %v525 = vpack.c.bf16 %v521, %v521
        %v526 = vpack.c.bf16 %v522, %v522
        %v527 = vpack.c.bf16 %v523, %v523
        %v528 = vpack.c.bf16 %v524, %v524
        %v529 = vunpack.c.l.bf16 %v525
        %v530 = vunpack.c.l.bf16 %v526
        %v531 = vunpack.c.l.bf16 %v527
        %v532 = vunpack.c.l.bf16 %v528
        %v533 = vmul.f32 %v529, 0.5
        %v534 = vmul.f32 %v530, 0.5
        %v535 = vmul.f32 %v531, 0.5
        %v536 = vmul.f32 %v532, 0.5
        %v537 = vpack.c.bf16 %v534, %v533
        %v538 = vpack.c.bf16 %v536, %v535
        %v539 = vld [vmem:[#allocation2] sm:$0xf]
        %v540 = vld [vmem:[#allocation2 + $0x4] sm:$0xf]
        %v541 = vld [vmem:[#allocation2 + $0x8] sm:$0xf]
        %v542 = vld [vmem:[#allocation2 + $0xc] sm:$0xf]
        %v543 = vld [vmem:[#allocation2 + $0x10] sm:$0xf]
        %v544 = vld [vmem:[#allocation2 + $0x14] sm:$0xf]
        %v545 = vld [vmem:[#allocation2 + $0x18] sm:$0xf]
        %v546 = vld [vmem:[#allocation2 + $0x1c] sm:$0xf]
        %v547 = vld [vmem:[#allocation2 + $0x20] sm:$0xf]
        %v548 = vld [vmem:[#allocation2 + $0x24] sm:$0xf]
        %v549 = vld [vmem:[#allocation2 + $0x28] sm:$0xf]
        %v550 = vld [vmem:[#allocation2 + $0x2c] sm:$0xf]
        %v551 = vld [vmem:[#allocation2 + $0x30] sm:$0xf]
        %v552 = vld [vmem:[#allocation2 + $0x34] sm:$0xf]
        %v553 = vld [vmem:[#allocation2 + $0x38] sm:$0xf]
        %v554 = vld [vmem:[#allocation2 + $0x3c] sm:$0xf]
        %v555 = vld [vmem:[%s6] sm:$0x1]
        %v557 = vperm.slane %v555, 0
        %v575 = vunpack.c.l.b16 %v539
        %v576 = vunpack.c.l.b16 %v540
        %v577 = vunpack.c.l.b16 %v541
        %v578 = vunpack.c.l.b16 %v542
        %v579 = vunpack.c.l.b16 %v543
        %v580 = vunpack.c.l.b16 %v544
        %v581 = vunpack.c.l.b16 %v545
        %v582 = vunpack.c.l.b16 %v546
        %v583 = vunpack.c.l.b16 %v547
        %v584 = vunpack.c.l.b16 %v548
        %v585 = vunpack.c.l.b16 %v549
        %v586 = vunpack.c.l.b16 %v550
        %v587 = vunpack.c.l.b16 %v551
        %v588 = vunpack.c.l.b16 %v552
        %v589 = vunpack.c.l.b16 %v553
        %v590 = vunpack.c.l.b16 %v554
        %v591 = vpack.c.b16 %v576, %v575
        %v592 = vpack.c.b16 %v578, %v577
        %v593 = vpack.c.b16 %v580, %v579
        %v594 = vpack.c.b16 %v582, %v581
        %v595 = vpack.c.b16 %v584, %v583
        %v596 = vpack.c.b16 %v586, %v585
        %v597 = vpack.c.b16 %v588, %v587
        %v598 = vpack.c.b16 %v590, %v589
        %607 = vmatpush.bf16.msra.mxu0 %v598
        %608 = vmatpush.bf16.msra.mxu0 %v597
        %609 = vmatpush.bf16.msra.mxu0 %v596
        %610 = vmatpush.bf16.msra.mxu0 %v595
        %611 = vmatpush.bf16.msra.mxu0 %v594
        %612 = vmatpush.bf16.msra.mxu0 %v593
        %613 = vmatpush.bf16.msra.mxu0 %v592
        %614 = vmatpush.bf16.msra.mxu0 %v591
        %615 = vmatmul.bf16.gmra.mxu0 %v537
        %v616 = vpop.f32.mrf.mxu0
        %v617 = vadd.f32 %v557, %v616
        %v618 = vpop.f32.mrf.mxu0
        %v619 = vadd.f32 %v557, %v618
        %620 = vmatmul.bf16.gmra.mxu0 %v538
        %v621 = vpop.f32.mrf.mxu0
        %v622 = vadd.f32 %v557, %v621
        %v623 = vpop.f32.mrf.mxu0
        %v624 = vadd.f32 %v557, %v623
        %625 = vdwg.mxu0
        %v626 = vpack.c.bf16 %v617, %v617
        %v627 = vpack.c.bf16 %v619, %v619
        %v628 = vpack.c.bf16 %v622, %v622
        %v629 = vpack.c.bf16 %v624, %v624
        %630 = vst [vmem:[%s297] sm:$0xf] %v626
        %631 = vst [vmem:[%s297 + $0x4] sm:$0xf] %v627
        %632 = vst [vmem:[%s297 + $0x8] sm:$0xf] %v628
        %633 = vst [vmem:[%s297 + $0xc] sm:$0xf] %v629
        %s634 = smul.u32 4, %s19
        %p635 = scmp.lt.s32.totalorder %s634, 7
        %s636 = scalar_select %p635, %s634, 7
        %s637 = smul.addr %s636, 4
        %s638 = scalar_lea.vmem %s7, %s637
        // Predicated region
        $region53: #{net_forward.1} parent=47 // pred_check
          %p639 = pneg %p189
        $region54: #{net_forward.1} parent=47 // pred_check_branch
          %641 = sbr.rel (%p639) target = $region56
        $region55: #{net_forward.1} parent=47 // pred_region
          %s642 = smul.u32 4, %s19
        $region56: #{net_forward.1} parent=47 // pred_fallthru
          _
      $region48: #{net_forward.1} parent=5 // pred_fallthru
        _
      %p643 = scmp.le.s32.totalorder 2, %s14
      // Predicated region
      $region57: #{net_forward.1} parent=5 // pred_check
        %p644 = pneg %p643
      $region58: #{net_forward.1} parent=5 // pred_check_branch
        %646 = sbr.rel (%p644) target = $region60
      $region59: #{net_forward.1} parent=5 // pred_region
        %s647 = ssub.s32 %s14, 2
        // Predicated region
        $region61: #{net_forward.1} parent=59 // pred_check
          %p648 = pneg %p195
        $region62: #{net_forward.1} parent=59 // pred_check_branch
          %650 = sbr.rel (%p648) target = $region64
        $region63: #{net_forward.1} parent=59 // pred_region
          %s651 = smul.u32 4, %s20
          %p652 = scmp.lt.s32.totalorder %s651, 7
          %s653 = scalar_select %p652, %s651, 7
          %s654 = smul.addr %s653, 4
          %s655 = scalar_lea.vmem %s7, %s654
        $region64: #{net_forward.1} parent=59 // pred_fallthru
          _
      $region60: #{net_forward.1} parent=5 // pred_fallthru
        _
    $region6: #{net_forward.1} parent=1 // loop_footer
      %s18 = sadd.s32 1, %s14
    $region7: #{net_forward.1} parent=1 // loop_footer_branch
      %13 = sbr.rel target = $region3
    $region8: #{net_forward.1} parent=1 // loop_exit
      _
    %656 = vsyncpa [#allocation3], 1
    %s657 = scalar_lea.sflag [#allocation3], 1
    %658 = vsyncpa %s657, 1

</llo_original>
